<compile_context>
chip_gen: v6e
topology: v6e:2x2x1
jax: 0.10.0
libtpu: 0.0.40
codegen_flags: <defaults>
</compile_context>

<pallas_src>
import jax
import jax.numpy as jnp
from jax.experimental import pallas as pl
from jax.experimental.pallas import tpu as pltpu


def _shortcut_kernel(w_ref, bias_ref, x_ref, res_ref, o_ref):
    # w_ref:    (Cout, Cin)     BN-scale-folded 1x1 conv weight (grid-resident)
    # bias_ref: (Cout, 1)       folded BN bias (beta - mean * scale), f32
    # x_ref:    (bB, Cin, tT)   input tile, NCT layout (time on lanes)
    # res_ref:  (bB, Cout, tT)  residual ("out_tensor") tile
    # o_ref:    (bB, Cout, tT)  output tile
    w = w_ref[...]
    bias = bias_ref[...]
    for b in range(x_ref.shape[0]):  # static unroll over the (small) batch block
        y = jnp.dot(w, x_ref[b], preferred_element_type=jnp.float32)  # (Cout, tT) on MXU
        y = y + bias                                                  # (Cout,1) bcast over T
        y = y + res_ref[b].astype(jnp.float32)                        # shortcut add, f32
        o_ref[b] = jnp.maximum(y, 0.0).astype(o_ref.dtype)            # ReLU, lane-dense store


def _round_up(x, m):
    return ((x + m - 1) // m) * m


def _vmem_physical_bytes():
    # Trace-time hardware query; fall back to the smallest generation (v7x, 64 MiB).
    try:
        return int(pltpu.get_tpu_info().vmem_capacity_bytes)
    except Exception:
        return 64 << 20


def _choose_tiles(B, Cin, Cout, T, x_it, r_it, o_it, vmem_phys):
    """Pick (T_padded, tT, nT, bB, ws_budget).

    tT is a 128-multiple divisor of the padded T, chosen so the double-buffered
    working set fits the per-generation VMEM budget; the grid never degenerates
    to a single step when avoidable (v7x megacore).
    """
    T128 = _round_up(T, 128)
    k = T128 // 128

    # Double-buffered tile working-set budget (leave headroom for the resident
    # weight/bias, compiler scratch and semaphores).
    ws_budget = max(4 << 20, int(vmem_phys * 0.40))
    fixed = 2 * (Cout * Cin * 4 + Cout * 4)
    budget = max(1 << 20, ws_budget - fixed)

    def tile_bytes(tT, bB):
        stream = 2 * bB * tT * (Cin * x_it + Cout * (r_it + o_it))  # dbl-buffered DMA tiles
        epilogue = 2 * bB * Cout * tT * 4                           # f32 epilogue temporaries
        return stream + epilogue

    def pick_tT(max_mult):
        best = 128
        for d in range(1, max_mult + 1):
            if k % d == 0 and tile_bytes(128 * d, 1) <= budget:
                best = 128 * d
        return best

    tT = pick_tT(k)
    # Keep >= 2 grid steps when the time axis allows it (v7x has 2 TensorCores).
    if B == 1 and tT == T128 and k > 1:
        tT = pick_tT(k - 1)
    nT = T128 // tT

    # Batch blocking: only when lane work per step is tiny, never below 2 steps.
    bB = 1
    if tT <= 512:
        for cand in range(2, min(B, 8) + 1):
            if (B % cand == 0 and (B // cand) * nT >= 2
                    and tile_bytes(tT, cand) <= budget):
                bB = cand
    return T128, tT, nT, bB, ws_budget


def shortcut_layer(in_tensor, out_tensor, weight, gamma, beta, running_mean,
                   running_var, eps=1e-5, compute_dtype=None,
                   donate_residual=False):
    """in_tensor: (B, Cin, T), out_tensor: (B, Cout, T) -- PyTorch NCT layout.
    weight: (Cout, Cin) (Conv1d kernel_size=1 weight squeezed).
    Returns ReLU(BN(Conv1d(in_tensor)) + out_tensor), shape (B, Cout, T)."""
    B, Cin, T = in_tensor.shape
    Cout = weight.shape[0]
    assert out_tensor.shape == (B, Cout, T)
    out_dtype = out_tensor.dtype

    # Fold eval-mode BatchNorm into the conv weight and a per-channel bias.
    scale = gamma.astype(jnp.float32) / jnp.sqrt(running_var.astype(jnp.float32) + eps)
    bias = beta.astype(jnp.float32) - running_mean.astype(jnp.float32) * scale
    x_dtype = compute_dtype if compute_dtype is not None else in_tensor.dtype
    w_scaled = (weight.astype(jnp.float32) * scale[:, None]).astype(x_dtype)
    bias2 = bias.reshape(Cout, 1)                      # (Cout, 1), f32
    x = in_tensor.astype(x_dtype)

    vmem_phys = _vmem_physical_bytes()
    T128, tT, nT, bB, ws_budget = _choose_tiles(
        B, Cin, Cout, T,
        jnp.dtype(x_dtype).itemsize,
        jnp.dtype(out_dtype).itemsize,
        jnp.dtype(out_dtype).itemsize,
        vmem_phys)

    # Pad the time axis to a multiple of 128 -> every store is an unmasked vst.
    pad = T128 - T
    res = out_tensor
    if pad:
        x = jnp.pad(x, ((0, 0), (0, 0), (0, pad)))
        res = jnp.pad(res, ((0, 0), (0, 0), (0, pad)))

    # Alias the residual input to the output when we own the buffer (padded
    # temp) or the caller donates out_tensor -> no second (B,Cout,T) HBM buffer.
    alias = {3: 0} if (pad or donate_residual) else {}

    vmem_limit = int(min(vmem_phys - (8 << 20), ws_budget + (24 << 20)))

    out = pl.pallas_call(
        _shortcut_kernel,
        out_shape=jax.ShapeDtypeStruct((B, Cout, T128), out_dtype),
        grid_spec=pltpu.PrefetchScalarGridSpec(
            num_scalar_prefetch=0,
            grid=(B // bB, nT),
            in_specs=[
                pl.BlockSpec((Cout, Cin), lambda b, t: (0, 0)),       # weight (resident)
                pl.BlockSpec((Cout, 1), lambda b, t: (0, 0)),         # bias   (resident)
                pl.BlockSpec((bB, Cin, tT), lambda b, t: (b, 0, t)),  # x tile
                pl.BlockSpec((bB, Cout, tT), lambda b, t: (b, 0, t)),  # residual tile
            ],
            out_specs=pl.BlockSpec((bB, Cout, tT), lambda b, t: (b, 0, t)),
        ),
        compiler_params=pltpu.CompilerParams(
            dimension_semantics=("parallel", "parallel"),
            vmem_limit_bytes=vmem_limit),
        input_output_aliases=alias,
    )(w_scaled, bias2, x, res)

    if pad:
        out = out[:, :, :T]
    return out


def _reference(in_tensor, out_tensor, weight, gamma, beta, running_mean,
               running_var, eps=1e-5):
    # Pure-JAX reference of the same (eval-mode) forward.
    y = jnp.einsum('bct,oc->bot', in_tensor.astype(jnp.float32),
                   weight.astype(jnp.float32))
    scale = gamma / jnp.sqrt(running_var + eps)
    bias = beta - running_mean * scale
    y = y * scale[None, :, None] + bias[None, :, None]
    return jnp.maximum(y + out_tensor.astype(jnp.float32), 0.0)


def _make_case(key, B, Cin, Cout, T):
    k1, k2, k3, k4, k5, k6, k7 = jax.random.split(key, 7)
    in_tensor = jax.random.normal(k1, (B, Cin, T), dtype=jnp.float32)
    out_tensor = jax.random.normal(k2, (B, Cout, T), dtype=jnp.float32)
    weight = jax.random.normal(k3, (Cout, Cin), dtype=jnp.float32) * 0.1
    gamma = 1.0 + 0.1 * jax.random.normal(k4, (Cout,), dtype=jnp.float32)
    beta = 0.1 * jax.random.normal(k5, (Cout,), dtype=jnp.float32)
    running_mean = 0.1 * jax.random.normal(k6, (Cout,), dtype=jnp.float32)
    running_var = jax.random.uniform(k7, (Cout,), jnp.float32, 0.5, 1.5)
    return (in_tensor, out_tensor, weight, gamma, beta, running_mean, running_var)


if __name__ == "__main__":
    key = jax.random.PRNGKey(0)
    ka, kb = jax.random.split(key)

    # Case 1: tiny shapes matching the module (B=2, Cin=4, Cout=8, T=16).
    # Exercises the T-padding (16 -> 128) + lane-dense store + residual aliasing path.
    args1 = _make_case(ka, B=2, Cin=4, Cout=8, T=16)
    out1 = jax.block_until_ready(shortcut_layer(*args1))
    ref1 = _reference(*args1)
    assert out1.shape == args1[1].shape
    assert jnp.allclose(out1, ref1, atol=1e-5, rtol=1e-5)

    # Case 2: non-128-divisible T with B=1 -> multi-step time grid (grid=(1,3)).
    args2 = _make_case(kb, B=1, Cin=8, Cout=16, T=260)
    out2 = jax.block_until_ready(shortcut_layer(*args2))
    ref2 = _reference(*args2)
    assert out2.shape == args2[1].shape
    assert jnp.allclose(out2, ref2, atol=1e-5, rtol=1e-5)

    print("KERNEL_OK")
</pallas_src>

<mosaic_0001>
module attributes {stable_mosaic.version = 11 : i64} {
  func.func @_shortcut_kernel(%arg0: i32, %arg1: i32, %arg2: memref<8x4xf32, #tpu.memory_space<vmem>>, %arg3: memref<8x1xf32, #tpu.memory_space<vmem>>, %arg4: memref<1x4x128xf32, #tpu.memory_space<vmem>>, %arg5: memref<1x8x128xf32, #tpu.memory_space<vmem>>, %arg6: memref<1x8x128xf32, #tpu.memory_space<vmem>>) attributes {dimension_semantics = [#tpu.dimension_semantics<parallel>, #tpu.dimension_semantics<parallel>], iteration_bounds = array<i64: 2, 1>, scalar_prefetch = 0 : i64, scratch_operands = 0 : i64, tpu.core_type = #tpu.core_type<tc>, window_params = [{pipeline_mode = #tpu.pipeline_mode<synchronous>, transform_indices = @transform_0, window_bounds = array<i64: 8, 4>}, {pipeline_mode = #tpu.pipeline_mode<synchronous>, transform_indices = @transform_1, window_bounds = array<i64: 8, 1>}, {transform_indices = @transform_2, window_bounds = array<i64: 1, 4, 128>}, {transform_indices = @transform_3, window_bounds = array<i64: 1, 8, 128>}, {transform_indices = @transform_4, window_bounds = array<i64: 1, 8, 128>}]} {
    %c0 = arith.constant 0 : index
    %c0_0 = arith.constant 0 : index
    %0 = vector.load %arg2[%c0, %c0_0] : memref<8x4xf32, #tpu.memory_space<vmem>>, vector<8x4xf32>
    %c0_1 = arith.constant 0 : index
    %c0_2 = arith.constant 0 : index
    %1 = vector.load %arg3[%c0_1, %c0_2] : memref<8x1xf32, #tpu.memory_space<vmem>>, vector<8x1xf32>
    %c0_3 = arith.constant 0 : index
    %c0_4 = arith.constant 0 : index
    %c0_5 = arith.constant 0 : index
    %2 = vector.load %arg4[%c0_3, %c0_4, %c0_5] : memref<1x4x128xf32, #tpu.memory_space<vmem>>, vector<1x4x128xf32>
    %3 = vector.shape_cast %2 : vector<1x4x128xf32> to vector<4x128xf32>
    %cst = arith.constant dense<0.000000e+00> : vector<8x128xf32>
    %4 = tpu.matmul %0, %3, %cst {dimension_numbers = #tpu.dot_dimension_numbers<[1], [0], [0], [1], [0, 0, 1, 1], [], []>} : vector<8x4xf32>, vector<4x128xf32>, vector<8x128xf32> -> vector<8x128xf32>
    %5 = vector.broadcast %1 : vector<8x1xf32> to vector<8x128xf32>
    %6 = arith.addf %4, %5 : vector<8x128xf32>
    %c0_6 = arith.constant 0 : index
    %c0_7 = arith.constant 0 : index
    %c0_8 = arith.constant 0 : index
    %7 = vector.load %arg5[%c0_6, %c0_7, %c0_8] : memref<1x8x128xf32, #tpu.memory_space<vmem>>, vector<1x8x128xf32>
    %8 = vector.shape_cast %7 : vector<1x8x128xf32> to vector<8x128xf32>
    %9 = arith.addf %6, %8 : vector<8x128xf32>
    %cst_9 = arith.constant 0.000000e+00 : f32
    %10 = vector.broadcast %cst_9 : f32 to vector<8x128xf32>
    %11 = arith.maximumf %9, %10 : vector<8x128xf32>
    %c0_10 = arith.constant 0 : index
    %c0_11 = arith.constant 0 : index
    %c0_12 = arith.constant 0 : index
    %12 = vector.load %arg6[%c0_10, %c0_11, %c0_12] : memref<1x8x128xf32, #tpu.memory_space<vmem>>, vector<1x8x128xf32>
    %13 = vector.shape_cast %12 : vector<1x8x128xf32> to vector<8x128xf32>
    %14 = vector.shape_cast %11 : vector<8x128xf32> to vector<1x8x128xf32>
    tpu.vector_store %arg6[%c0_10, %c0_11, %c0_12], %14 {strides = array<i32>} : memref<1x8x128xf32, #tpu.memory_space<vmem>>, vector<1x8x128xf32>,
    return
  }
  func.func @transform_0(%arg0: i32, %arg1: i32) -> (i32, i32) {
    %c0_i32 = arith.constant 0 : i32
    %c0_i32_0 = arith.constant 0 : i32
    %c0_i32_1 = arith.constant 0 : i32
    return %c0_i32, %c0_i32_0 : i32, i32
  }
  func.func @transform_1(%arg0: i32, %arg1: i32) -> (i32, i32) {
    %c0_i32 = arith.constant 0 : i32
    %c0_i32_0 = arith.constant 0 : i32
    %c0_i32_1 = arith.constant 0 : i32
    return %c0_i32, %c0_i32_0 : i32, i32
  }
  func.func @transform_2(%arg0: i32, %arg1: i32) -> (i32, i32, i32) {
    %c0_i32 = arith.constant 0 : i32
    %c0_i32_0 = arith.constant 0 : i32
    return %arg0, %c0_i32, %arg1 : i32, i32, i32
  }
  func.func @transform_3(%arg0: i32, %arg1: i32) -> (i32, i32, i32) {
    %c0_i32 = arith.constant 0 : i32
    %c0_i32_0 = arith.constant 0 : i32
    return %arg0, %c0_i32, %arg1 : i32, i32, i32
  }
  func.func @transform_4(%arg0: i32, %arg1: i32) -> (i32, i32, i32) {
    %c0_i32 = arith.constant 0 : i32
    %c0_i32_0 = arith.constant 0 : i32
    return %arg0, %c0_i32, %arg1 : i32, i32, i32
  }
}

</mosaic_0001>

<llo_original>
// kernel: tpu_custom_call.1
$region0: #{tpu_custom_call.1}
  #allocation0 [shape = 'u32[]', space=smem, size = 0x4, offset = 0x4, fixed_abs, tag = 'smem constant byte address 0x4 - core index']
  #allocation1 [shape = 'u32[144,128]{1,0:T(1,128)}', space=vmem, size = 0x12000, scoped, tag = 'internal scratch']
  %s0 = inlined_call_operand.vmem [shape: f32[8,4], index: 0, kind: input, shape index: {}]
  %s1 = inlined_call_operand.vmem [shape: f32[8,1], index: 1, kind: input, shape index: {}]
  %s2 = inlined_call_operand.vmem [shape: f32[2,4,128], index: 2, kind: input, shape index: {}]
  %s3 = inlined_call_operand.hbm [shape: f32[2,8,128], index: 3, kind: input, shape index: {}, may-alias: {3,4}]
  %s4 = inlined_call_operand.hbm [shape: f32[2,8,128], index: 4, kind: output, shape index: {}, may-alias: {3,4}]
  %s5 = sld [smem:[#allocation0]]
  $region53: #{tpu_custom_call.1} parent=0
    _
  %s7 = ssub.s32 1, %s5
  %s8 = scalar_select 0, %s7, %s5
  $region1: #{tpu_custom_call.1} parent=0
    #allocation2 [shape = 'u8[8192]{0}', space=vmem, size = 0x2000, scoped, tag = 'input window, operand 3']
    #allocation3 [shape = 's32[2]{0}', space=sflag, size = 0x8, scoped, tag = 'scoped memory for tpu_custom_call.1']
    #allocation4 [shape = 's32[2]{0}', space=sflag, size = 0x8, scoped, tag = 'scoped memory for tpu_custom_call.1']
    #allocation5 [shape = 'u8[8192]{0}', space=vmem, size = 0x2000, scoped, tag = 'output window, operand 0']
    %9 = vsyncpa [#allocation3], 0
    %s10 = scalar_lea.sflag [#allocation3], 1
    %11 = vsyncpa %s10, 0
    %12 = vsyncpa [#allocation4], 0
    %s13 = scalar_lea.sflag [#allocation4], 1
    %14 = vsyncpa %s13, 0
    loop: start=0, step=1, limit=4
    $region2: #{tpu_custom_call.1} parent=1 // loop_pre_header
      _
    $region3: #{tpu_custom_call.1} parent=1 // loop_header
      %s16 = sphi 0, %s20
      %p17 = scmp.ge.s32.totalorder %s16, 4
      %s23 = sphi 0, %s35
      %s24 = sphi 0, %s31
      %s25 = sphi 0, %s23
      %s26 = sphi 0, %s24
      %s27 = sphi 0, %s25
      %s28 = sphi 0, %s26
      %s36 = sphi 0, %s36
      %s38 = sphi 0, %s36
      %s39 = sphi 0, %s38
      %s53 = sphi 0, %s39
      %s57 = sphi 0, %s57
      %s59 = sphi 0, %s57
      %s60 = sphi 0, %s59
      %s74 = sphi 0, %s60
      %s82 = sphi 0, %s84
      %s85 = sphi 0, %s82
      %s86 = sphi 0, %s85
      %s102 = sphi 0, %s86
      %s110 = sphi 0, %s112
      %s113 = sphi 0, %s110
      %s114 = sphi 0, %s113
      %s130 = sphi 0, %s114
      %s138 = sphi 0, %s140
      %s141 = sphi 0, %s138
      %s142 = sphi 0, %s141
      %s158 = sphi 0, %s142
    $region4: #{tpu_custom_call.1} parent=1 // loop_header_branch
      %19 = sbr.rel (%p17) target = $region8
    $region5: #{tpu_custom_call.1} parent=1 // loop_body
      %s21 = ssub.s32 %s16, 1
      %s22 = ssub.s32 %s16, 2
      %s29 = sadd.s32 1, %s24
      %p30 = scmp.ge.s32.totalorder %s29, 1
      %s31 = scalar_select %p30, 0, %s29
      %s32 = sadd.s32 1, %s23
      %s33 = scalar_select %p30, %s32, %s23
      %p34 = scmp.ge.s32.totalorder %s33, 2
      %s35 = scalar_select %p34, 0, %s33
      %s37 = sadd.s32 %s36, 1
      %p40 = scmp.eq.s32.totalorder %s16, 1
      %p41 = scmp.ne.s32.totalorder %s36, %s38
      %p42 = scmp.eq.s32.totalorder %s16, 0
      %p43 = por %p41, %p42
      %p44 = scmp.ne.s32.totalorder %s36, %s38
      %p45 = scmp.eq.s32.totalorder %s21, 1
      %p46 = por %p44, %p45
      %p47 = scmp.ne.s32.totalorder %s38, %s39
      %p48 = scmp.eq.s32.totalorder %s21, 0
      %p49 = por %p47, %p48
      %p50 = scmp.ne.s32.totalorder %s38, %s39
      %p51 = scmp.eq.s32.totalorder %s22, 1
      %p52 = por %p50, %p51
      %p54 = scmp.ne.s32.totalorder %s39, %s53
      %p55 = scmp.eq.s32.totalorder %s22, 0
      %p56 = por %p54, %p55
      %s58 = sadd.s32 %s57, 1
      %p61 = scmp.eq.s32.totalorder %s16, 1
      %p62 = scmp.ne.s32.totalorder %s57, %s59
      %p63 = scmp.eq.s32.totalorder %s16, 0
      %p64 = por %p62, %p63
      %p65 = scmp.ne.s32.totalorder %s57, %s59
      %p66 = scmp.eq.s32.totalorder %s21, 1
      %p67 = por %p65, %p66
      %p68 = scmp.ne.s32.totalorder %s59, %s60
      %p69 = scmp.eq.s32.totalorder %s21, 0
      %p70 = por %p68, %p69
      %p71 = scmp.ne.s32.totalorder %s59, %s60
      %p72 = scmp.eq.s32.totalorder %s22, 1
      %p73 = por %p71, %p72
      %p75 = scmp.ne.s32.totalorder %s60, %s74
      %p76 = scmp.eq.s32.totalorder %s22, 0
      %p77 = por %p75, %p76
      %s78 = ssub.s32 %s23, %s35
      %s79 = ssub.s32 %s24, %s31
      %s80 = sor.u32 %s78, %s79
      %p81 = scmp.eq.s32.totalorder %s80, 0
      %s83 = sadd.s32 %s82, 1
      %s84 = scalar_select %p81, %s82, %s83
      %p87 = pneg %p81
      %p88 = scmp.eq.s32.totalorder %s16, 1
      %p89 = por %p87, %p88
      %p90 = scmp.ne.s32.totalorder %s82, %s85
      %p91 = scmp.eq.s32.totalorder %s16, 0
      %p92 = por %p90, %p91
      %p93 = scmp.ne.s32.totalorder %s82, %s85
      %p94 = scmp.eq.s32.totalorder %s21, 1
      %p95 = por %p93, %p94
      %p96 = scmp.ne.s32.totalorder %s85, %s86
      %p97 = scmp.eq.s32.totalorder %s21, 0
      %p98 = por %p96, %p97
      %p99 = scmp.ne.s32.totalorder %s85, %s86
      %p100 = scmp.eq.s32.totalorder %s22, 1
      %p101 = por %p99, %p100
      %p103 = scmp.ne.s32.totalorder %s86, %s102
      %p104 = scmp.eq.s32.totalorder %s22, 0
      %p105 = por %p103, %p104
      %s106 = ssub.s32 %s23, %s35
      %s107 = ssub.s32 %s24, %s31
      %s108 = sor.u32 %s106, %s107
      %p109 = scmp.eq.s32.totalorder %s108, 0
      %s111 = sadd.s32 %s110, 1
      %s112 = scalar_select %p109, %s110, %s111
      %p115 = pneg %p109
      %p116 = scmp.eq.s32.totalorder %s16, 1
      %p117 = por %p115, %p116
      %p118 = scmp.ne.s32.totalorder %s110, %s113
      %p119 = scmp.eq.s32.totalorder %s16, 0
      %p120 = por %p118, %p119
      %p121 = scmp.ne.s32.totalorder %s110, %s113
      %p122 = scmp.eq.s32.totalorder %s21, 1
      %p123 = por %p121, %p122
      %p124 = scmp.ne.s32.totalorder %s113, %s114
      %p125 = scmp.eq.s32.totalorder %s21, 0
      %p126 = por %p124, %p125
      %p127 = scmp.ne.s32.totalorder %s113, %s114
      %p128 = scmp.eq.s32.totalorder %s22, 1
      %p129 = por %p127, %p128
      %p131 = scmp.ne.s32.totalorder %s114, %s130
      %p132 = scmp.eq.s32.totalorder %s22, 0
      %p133 = por %p131, %p132
      %s134 = ssub.s32 %s23, %s35
      %s135 = ssub.s32 %s24, %s31
      %s136 = sor.u32 %s134, %s135
      %p137 = scmp.eq.s32.totalorder %s136, 0
      %s139 = sadd.s32 %s138, 1
      %s140 = scalar_select %p137, %s138, %s139
      %p143 = pneg %p137
      %p144 = scmp.eq.s32.totalorder %s16, 1
      %p145 = por %p143, %p144
      %p146 = scmp.ne.s32.totalorder %s138, %s141
      %p147 = scmp.eq.s32.totalorder %s16, 0
      %p148 = por %p146, %p147
      %p149 = scmp.ne.s32.totalorder %s138, %s141
      %p150 = scmp.eq.s32.totalorder %s21, 1
      %p151 = por %p149, %p150
      %p152 = scmp.ne.s32.totalorder %s141, %s142
      %p153 = scmp.eq.s32.totalorder %s21, 0
      %p154 = por %p152, %p153
      %p155 = scmp.ne.s32.totalorder %s141, %s142
      %p156 = scmp.eq.s32.totalorder %s22, 1
      %p157 = por %p155, %p156
      %p159 = scmp.ne.s32.totalorder %s142, %s158
      %p160 = scmp.eq.s32.totalorder %s22, 0
      %p161 = por %p159, %p160
      %p162 = scmp.le.s32.totalorder 1, %s16
      %p163 = scmp.lt.s32.totalorder %s16, 3
      %p164 = pnand %p162, %p163
      %p165 = pneg %p164
      // Predicated region
      $region9: #{tpu_custom_call.1} parent=5 // pred_check
        _
      $region10: #{tpu_custom_call.1} parent=5 // pred_check_branch
        %167 = sbr.rel (%p164) target = $region12
      $region11: #{tpu_custom_call.1} parent=5 // pred_region
        %s168 = ssub.s32 %s16, 1
        // Predicated region
        $region13: #{tpu_custom_call.1} parent=11 // pred_check
          %p169 = pneg %p49
        $region14: #{tpu_custom_call.1} parent=11 // pred_check_branch
          %171 = sbr.rel (%p169) target = $region16
        $region15: #{tpu_custom_call.1} parent=11 // pred_region
          _
        $region16: #{tpu_custom_call.1} parent=11 // pred_fallthru
          _
        // Predicated region
        $region17: #{tpu_custom_call.1} parent=11 // pred_check
          %p172 = pneg %p70
        $region18: #{tpu_custom_call.1} parent=11 // pred_check_branch
          %174 = sbr.rel (%p172) target = $region20
        $region19: #{tpu_custom_call.1} parent=11 // pred_region
          _
        $region20: #{tpu_custom_call.1} parent=11 // pred_fallthru
          _
      $region12: #{tpu_custom_call.1} parent=5 // pred_fallthru
        _
      %p175 = scmp.lt.s32.totalorder %s16, 2
      // Predicated region
      $region21: #{tpu_custom_call.1} parent=5 // pred_check
        %p176 = pneg %p175
      $region22: #{tpu_custom_call.1} parent=5 // pred_check_branch
        %178 = sbr.rel (%p176) target = $region24
      $region23: #{tpu_custom_call.1} parent=5 // pred_region
        // Predicated region
        $region25: #{tpu_custom_call.1} parent=23 // pred_check
          %p179 = pneg %p92
        $region26: #{tpu_custom_call.1} parent=23 // pred_check_branch
          %181 = sbr.rel (%p179) target = $region28
        $region27: #{tpu_custom_call.1} parent=23 // pred_region
          %p182 = scmp.lt.s32.totalorder %s23, 1
          %s183 = scalar_select %p182, %s23, 1
          %p184 = scmp.lt.s32.totalorder %s24, 0
          %s185 = scalar_select %p184, %s24, 0
          %s186 = sadd.s32 %s185, %s183
          %s187 = smul.addr %s186, 4
          %s188 = scalar_lea.vmem %s2, %s187
        $region28: #{tpu_custom_call.1} parent=23 // pred_fallthru
          _
        // Predicated region
        $region29: #{tpu_custom_call.1} parent=23 // pred_check
          %p189 = pneg %p120
        $region30: #{tpu_custom_call.1} parent=23 // pred_check_branch
          %191 = sbr.rel (%p189) target = $region32
        $region31: #{tpu_custom_call.1} parent=23 // pred_region
          %s192 = sand.u32 %s110, 1
          %s193 = scalar_lea.sflag [#allocation3], %s192
          %s194 = sand.u32 %s110, 1
          %s195 = smul.addr %s194, 8
          %s196 = scalar_lea.vmem [#allocation2], %s195
          %s198 = ssub.s32 128, 128
          %199 = vsyncadd %s193, %s198
          %s200 = sadd.s32 %s24, %s23
          %s201 = smul.addr %s200, 128
          %s202 = scalar_lea.hbm %s3, %s201
          %s204 = sshll.u32 %s196, 4
          %s205 = int_to_ptr.vmem [resolvable:$true] %s204
          %207 = dma.hbm_to_vmem [thread:$0]  %s202, 128, %s205, %s193
        $region32: #{tpu_custom_call.1} parent=23 // pred_fallthru
          _
      $region24: #{tpu_custom_call.1} parent=5 // pred_fallthru
        _
      %p208 = scmp.le.s32.totalorder 1, %s16
      %p209 = scmp.lt.s32.totalorder %s16, 3
      %p210 = pnand %p208, %p209
      %p211 = pneg %p210
      // Predicated region
      $region33: #{tpu_custom_call.1} parent=5 // pred_check
        _
      $region34: #{tpu_custom_call.1} parent=5 // pred_check_branch
        %213 = sbr.rel (%p210) target = $region36
      $region35: #{tpu_custom_call.1} parent=5 // pred_region
        %s214 = ssub.s32 %s16, 1
        %s215 = sand.u32 %s113, 1
        %s216 = scalar_lea.sflag [#allocation3], %s215
        %s217 = sand.u32 %s113, 1
        %s218 = smul.addr %s217, 8
        %s219 = scalar_lea.vmem [#allocation2], %s218
        // Predicated region
        $region37: #{tpu_custom_call.1} parent=35 // pred_check
          %p220 = pneg %p126
        $region38: #{tpu_custom_call.1} parent=35 // pred_check_branch
          %222 = sbr.rel (%p220) target = $region40
        $region39: #{tpu_custom_call.1} parent=35 // pred_region
          %223 = dma.done %s216, 128
        $region40: #{tpu_custom_call.1} parent=35 // pred_fallthru
          _
        %p224 = pneg %p49
        %p225 = pneg %p46
        %p226 = pneg %p70
        %p227 = pneg %p67
        %p228 = scmp.lt.s32.totalorder %s25, 1
        %s229 = scalar_select %p228, %s25, 1
        %p230 = scmp.lt.s32.totalorder %s26, 0
        %s231 = scalar_select %p230, %s26, 0
        %s232 = sadd.s32 %s231, %s229
        %s233 = smul.addr %s232, 4
        %s234 = scalar_lea.vmem %s2, %s233
        %p235 = pneg %p98
        %p236 = pneg %p95
        %s237 = sand.u32 %s113, 1
        %s238 = scalar_lea.sflag [#allocation3], %s237
        %s239 = sand.u32 %s113, 1
        %s240 = smul.addr %s239, 8
        %s241 = scalar_lea.vmem [#allocation2], %s240
        %p242 = pneg %p126
        %p243 = pneg %p123
        %p244 = pneg %p154
        %p245 = pneg %p151
        %s246 = sand.u32 %s141, 1
        %s247 = scalar_lea.sflag [#allocation4], %s246
        %s248 = sand.u32 %s141, 1
        %s249 = smul.addr %s248, 8
        %s250 = scalar_lea.vmem [#allocation5], %s249
        %p251 = scmp.lt.s32.totalorder %s25, 1
        %s252 = scalar_select %p251, %s25, 1
        %p253 = scmp.lt.s32.totalorder %s26, 0
        %s254 = scalar_select %p253, %s26, 0
        %s255 = sadd.s32 %s254, %s252
        %s256 = smul.addr %s255, 4
        %s257 = scalar_lea.vmem %s2, %s256
        %v258 = vld [vmem:[%s0] sm:$0xff]
        %v259 = vld [vmem:[%s1] sm:$0xff]
        %v260 = vld [vmem:[%s257] sm:$0xf]
        %262 = vset.pattern.permute.xlu0 0
        %263 = vperm.xlu0 %262, %v259
        %v264 = vpop.permute.xlu0 %263
        %vm266 = vcmask 31744
        %v268 = vsel %vm266, %v258, 0
        %vm270 = vcmask 1043456
        %v272 = vsel %vm270, %v260, 0
        %274 = vmatprep.subr.mxu0 0.0
        %275 = vmatpush1.msra.mxu0 0.0
        %276 = vmatprep.subr.mxu0 0.0
        %277 = vmatpush1.msra.mxu0 0.0
        %278 = vmatprep.subr.mxu0 0.0
        %279 = vmatpush1.msra.mxu0 0.0
        %280 = vmatprep.subr.mxu0 0.0
        %281 = vmatpush1.msra.mxu0 0.0
        %282 = vmatprep.subr.mxu0 0.0
        %283 = vmatpush1.msra.mxu0 0.0
        %284 = vmatprep.subr.mxu0 0.0
        %285 = vmatpush1.msra.mxu0 0.0
        %286 = vmatprep.subr.mxu0 0.0
        %287 = vmatpush1.msra.mxu0 0.0
        %288 = vmatprep.subr.mxu0 0.0
        %289 = vmatpush1.msra.mxu0 0.0
        %290 = vmatprep.subr.mxu0 0.0
        %291 = vmatpush1.msra.mxu0 0.0
        %292 = vmatprep.subr.mxu0 0.0
        %293 = vmatpush1.msra.mxu0 0.0
        %294 = vmatprep.subr.mxu0 0.0
        %295 = vmatpush1.msra.mxu0 0.0
        %296 = vmatprep.subr.mxu0 0.0
        %297 = vmatpush1.msra.mxu0 0.0
        %298 = vmatprep.subr.mxu0 0.0
        %299 = vmatpush1.msra.mxu0 0.0
        %300 = vmatprep.subr.mxu0 0.0
        %301 = vmatpush1.msra.mxu0 0.0
        %302 = vmatprep.subr.mxu0 0.0
        %303 = vmatpush1.msra.mxu0 0.0
        %304 = vmatprep.subr.mxu0 0.0
        %305 = vmatpush1.msra.mxu0 %v272
        %306 = vmatprep.subr.mxu0 0.0
        %307 = vmatpush2.msra.mxu0 0.0
        %308 = vmatprep.subr.mxu0 0.0
        %309 = vmatpush2.msra.mxu0 0.0
        %310 = vmatprep.subr.mxu0 0.0
        %311 = vmatpush2.msra.mxu0 0.0
        %312 = vmatprep.subr.mxu0 0.0
        %313 = vmatpush2.msra.mxu0 0.0
        %314 = vmatprep.subr.mxu0 0.0
        %315 = vmatpush2.msra.mxu0 0.0
        %316 = vmatprep.subr.mxu0 0.0
        %317 = vmatpush2.msra.mxu0 0.0
        %318 = vmatprep.subr.mxu0 0.0
        %319 = vmatpush2.msra.mxu0 0.0
        %320 = vmatprep.subr.mxu0 0.0
        %321 = vmatpush2.msra.mxu0 0.0
        %322 = vmatprep.subr.mxu0 0.0
        %323 = vmatpush2.msra.mxu0 0.0
        %324 = vmatprep.subr.mxu0 0.0
        %325 = vmatpush2.msra.mxu0 0.0
        %326 = vmatprep.subr.mxu0 0.0
        %327 = vmatpush2.msra.mxu0 0.0
        %328 = vmatprep.subr.mxu0 0.0
        %329 = vmatpush2.msra.mxu0 0.0
        %330 = vmatprep.subr.mxu0 0.0
        %331 = vmatpush2.msra.mxu0 0.0
        %332 = vmatprep.subr.mxu0 0.0
        %333 = vmatpush2.msra.mxu0 0.0
        %334 = vmatprep.subr.mxu0 0.0
        %335 = vmatpush2.msra.mxu0 0.0
        %336 = vmatprep.subr.mxu0 0.0
        %337 = vmatpush2.msra.mxu0 0.0
        %338 = vmatprep.mubr.f32.mxu0 0.0
        %339 = vmatmul.mubr.f32.gmra.mxu0 %v268
        %v340 = vpop.f32.mrf.mxu0
        %v341 = vadd.f32 %v264, %v340
        %v342 = vpop.f32.mrf.mxu0
        %343 = vdwg.mxu0
        %v344 = vld [vmem:[%s219] sm:$0xff]
        %v345 = vadd.f32 %v341, %v344
        %v346 = vmax.f32 %v345, 0.0
        %347 = vst [vmem:[%s250] sm:$0xff] %v346
        %s348 = sand.u32 %s141, 1
        %s349 = scalar_lea.sflag [#allocation4], %s348
        %s350 = sand.u32 %s141, 1
        %s351 = smul.addr %s350, 8
        %s352 = scalar_lea.vmem [#allocation5], %s351
        // Predicated region
        $region41: #{tpu_custom_call.1} parent=35 // pred_check
          %p353 = pneg %p151
        $region42: #{tpu_custom_call.1} parent=35 // pred_check_branch
          %355 = sbr.rel (%p353) target = $region44
        $region43: #{tpu_custom_call.1} parent=35 // pred_region
          %s357 = ssub.s32 128, 128
          %358 = vsyncadd %s349, %s357
          %s359 = sadd.s32 %s26, %s25
          %s360 = smul.addr %s359, 128
          %s361 = scalar_lea.hbm %s4, %s360
          %s363 = sshll.u32 %s352, 4
          %s364 = int_to_ptr.vmem [resolvable:$true] %s363
          %366 = dma.vmem_to_hbm [thread:$0]  %s364, 128, %s361, %s349
        $region44: #{tpu_custom_call.1} parent=35 // pred_fallthru
          _
      $region36: #{tpu_custom_call.1} parent=5 // pred_fallthru
        _
      %p367 = scmp.le.s32.totalorder 2, %s16
      // Predicated region
      $region45: #{tpu_custom_call.1} parent=5 // pred_check
        %p368 = pneg %p367
      $region46: #{tpu_custom_call.1} parent=5 // pred_check_branch
        %370 = sbr.rel (%p368) target = $region48
      $region47: #{tpu_custom_call.1} parent=5 // pred_region
        %s371 = ssub.s32 %s16, 2
        // Predicated region
        $region49: #{tpu_custom_call.1} parent=47 // pred_check
          %p372 = pneg %p157
        $region50: #{tpu_custom_call.1} parent=47 // pred_check_branch
          %374 = sbr.rel (%p372) target = $region52
        $region51: #{tpu_custom_call.1} parent=47 // pred_region
          %s375 = sand.u32 %s142, 1
          %s376 = scalar_lea.sflag [#allocation4], %s375
          %s377 = sand.u32 %s142, 1
          %s378 = smul.addr %s377, 8
          %s379 = scalar_lea.vmem [#allocation5], %s378
          %380 = dma.done %s376, 128
        $region52: #{tpu_custom_call.1} parent=47 // pred_fallthru
          _
      $region48: #{tpu_custom_call.1} parent=5 // pred_fallthru
        _
    $region6: #{tpu_custom_call.1} parent=1 // loop_footer
      %s20 = sadd.s32 1, %s16
    $region7: #{tpu_custom_call.1} parent=1 // loop_footer_branch
      %15 = sbr.rel target = $region3
    $region8: #{tpu_custom_call.1} parent=1 // loop_exit
      _
    %381 = vsyncpa [#allocation3], 1
    %s382 = scalar_lea.sflag [#allocation3], 1
    %383 = vsyncpa %s382, 1
    %384 = vsyncpa [#allocation4], 1
    %s385 = scalar_lea.sflag [#allocation4], 1
    %386 = vsyncpa %s385, 1

</llo_original>
